<compile_context>
chip_gen: v7x
topology: tpu7x:2x2x1
jax: 0.10.0
libtpu: 0.0.40
codegen_flags: <defaults>
</compile_context>

<pallas_src>
import functools
import math

import jax
import jax.numpy as jnp
from jax import lax
from jax.experimental import pallas as pl
from jax.experimental.pallas import tpu as pltpu


# ------------------------------ VMEM budget ----------------------------------

@functools.lru_cache(maxsize=None)
def _vmem_limit_bytes():
    cap = 128 * 1024 * 1024
    try:
        info_cap = int(pltpu.get_tpu_info().vmem_capacity_bytes)
        if info_cap >= 32 * 1024 * 1024:
            cap = info_cap
    except Exception:
        pass
    # ~5/8 of physical VMEM (80 MiB on v5e/v6e, 40 MiB on v7x) leaves headroom
    # for compiler-internal scratch.
    return min(96 * 1024 * 1024, (cap * 5) // 8)


# ----------------------------- in-kernel helpers -----------------------------

def _layernorm(x, gamma, beta, eps=1e-12):
    x = x.astype(jnp.float32)
    mean = jnp.mean(x, axis=-1, keepdims=True)
    var = jnp.mean((x - mean) ** 2, axis=-1, keepdims=True)
    return (x - mean) * jax.lax.rsqrt(var + eps) * gamma + beta


def _pick_sublane_tile(n, target):
    """Largest divisor of n that is <= target and a multiple of 8 (else n)."""
    if n <= target:
        return n
    for t in range(target, 0, -1):
        if n % t == 0 and t % 8 == 0:
            return t
    return n


def _pick_lane_tile(n, target):
    """Largest divisor of n that is <= target and a multiple of 128 (else n)."""
    if n <= target:
        return n
    for t in range(target, 0, -1):
        if n % t == 0 and t % 128 == 0:
            return t
    return n


def _full_spec(p):
    shape = tuple(p.shape)
    return pl.BlockSpec(shape, lambda *_: (0,) * len(shape))


# --------------------- embedding sum + layernorm kernel ----------------------

def embed_ln_kernel(tok_ref, seg_ref, pos_ref, g_ref, b_ref, o_ref):
    # Fused tok + seg + pos add (f32) + layernorm, bf16 store.
    x = (tok_ref[0].astype(jnp.float32)
         + seg_ref[0].astype(jnp.float32)
         + pos_ref[0].astype(jnp.float32))
    o_ref[0] = _layernorm(x, g_ref[...], b_ref[...]).astype(o_ref.dtype)


def embed_layernorm(tok, seg, pos, gamma, beta):
    B, S, D = tok.shape
    ts = _pick_sublane_tile(S, 512)
    return pl.pallas_call(
        embed_ln_kernel,
        out_shape=jax.ShapeDtypeStruct((B, S, D), jnp.bfloat16),
        grid=(B, S // ts),
        in_specs=[
            pl.BlockSpec((1, ts, D), lambda b, s: (b, s, 0)),   # token embeddings
            pl.BlockSpec((1, ts, D), lambda b, s: (b, s, 0)),   # segment embeddings
            pl.BlockSpec((1, ts, D), lambda b, s: (0, s, 0)),   # positional embeddings
            pl.BlockSpec((1, D), lambda b, s: (0, 0)),
            pl.BlockSpec((1, D), lambda b, s: (0, 0)),
        ],
        out_specs=pl.BlockSpec((1, ts, D), lambda b, s: (b, s, 0)),
        compiler_params=pltpu.CompilerParams(
            dimension_semantics=("parallel", "parallel"),
            vmem_limit_bytes=_vmem_limit_bytes()),
    )(tok, seg, pos, gamma, beta)


# -------------------- attention (+ residual + LN1) kernel --------------------

def attn_kernel(num_heads, tq,
                xf_ref, bias_ref,
                wq_ref, bq_ref, wk_ref, bk_ref, wv_ref, bv_ref,
                wo_ref, bo_ref, g_ref, b_ref,
                o_ref,
                k_scr, v_scr, ctx_scr):
    q_idx = pl.program_id(1)
    S, D = xf_ref.shape[1], xf_ref.shape[2]
    dh = D // num_heads
    scale = jnp.float32(1.0 / math.sqrt(dh))

    # K / V projections once per batch element; persist in VMEM scratch across
    # query tiles (query axis is "arbitrary", so iteration order is sequential).
    @pl.when(q_idx == 0)
    def _():
        xf = xf_ref[0]                                    # (S, D) bf16
        k = jnp.dot(xf, wk_ref[...], preferred_element_type=jnp.float32) + bk_ref[...]
        v = jnp.dot(xf, wv_ref[...], preferred_element_type=jnp.float32) + bv_ref[...]
        k_scr[...] = k.astype(jnp.bfloat16)
        v_scr[...] = v.astype(jnp.bfloat16)

    # Query rows for this grid step, sliced from the (already resident) full
    # sequence block — no duplicated input stream.
    row0 = pl.multiple_of(q_idx * tq, tq)
    xq_b = xf_ref[0, pl.ds(row0, tq), :]                  # (TQ, D) bf16

    q = jnp.dot(xq_b, wq_ref[...], preferred_element_type=jnp.float32) + bq_ref[...]
    qb = (q * scale).astype(jnp.bfloat16)                 # fold 1/sqrt(dh) into q once

    bias = bias_ref[0]                                    # (1, S) f32 additive mask

    # Per-head attention (static unroll == batched-head einsum MXU work).
    # scores: contract dim 1 of both operands (no explicit transpose of K).
    # Head contexts land in a (TQ, D) f32 scratch at static lane offsets (no
    # sub-128-lane concatenate), so Wo is one full-width matmul.
    for h in range(num_heads):
        sl = slice(h * dh, (h + 1) * dh)
        k_h = k_scr[:, sl]                                # (S, dh) bf16
        v_h = v_scr[:, sl]                                # (S, dh) bf16
        scores = lax.dot_general(
            qb[:, sl], k_h,
            dimension_numbers=(((1,), (1,)), ((), ())),
            preferred_element_type=jnp.float32) + bias    # (TQ, S) f32
        m = jnp.max(scores, axis=-1, keepdims=True)
        e = jnp.exp(scores - m)
        s = jnp.sum(e, axis=-1, keepdims=True)
        p = (e * pl.reciprocal(s, approx=True)).astype(jnp.bfloat16)
        ctx_scr[:, sl] = jnp.dot(p, v_h, preferred_element_type=jnp.float32)

    ctx = ctx_scr[...].astype(jnp.bfloat16)               # (TQ, D)
    attn = jnp.dot(ctx, wo_ref[...], preferred_element_type=jnp.float32) + bo_ref[...]
    # TODO(synk): dropout (p=0.01) omitted — identity in eval mode.
    out = _layernorm(xq_b.astype(jnp.float32) + attn, g_ref[...], b_ref[...])
    o_ref[0] = out.astype(o_ref.dtype)


_ATTN_PARAMS = ("wq", "bq", "wk", "bk", "wv", "bv", "wo", "bo", "ln1_g", "ln1_b")


def attention_block(x, bias, params, num_heads):
    B, S, D = x.shape
    tq = _pick_sublane_tile(S, 256)
    plist = [params[n] for n in _ATTN_PARAMS]
    in_specs = [
        pl.BlockSpec((1, S, D), lambda b, q: (b, 0, 0)),    # full sequence (bf16)
        pl.BlockSpec((1, 1, S), lambda b, q: (b, 0, 0)),    # additive mask bias (f32)
    ] + [_full_spec(p) for p in plist]
    return pl.pallas_call(
        functools.partial(attn_kernel, num_heads, tq),
        out_shape=jax.ShapeDtypeStruct((B, S, D), jnp.bfloat16),
        grid=(B, S // tq),
        in_specs=in_specs,
        out_specs=pl.BlockSpec((1, tq, D), lambda b, q: (b, q, 0)),
        scratch_shapes=[
            pltpu.VMEM((S, D), jnp.bfloat16),               # K (per batch element)
            pltpu.VMEM((S, D), jnp.bfloat16),               # V (per batch element)
            pltpu.VMEM((tq, D), jnp.float32),               # head-context staging
        ],
        compiler_params=pltpu.CompilerParams(
            dimension_semantics=("parallel", "arbitrary"),
            vmem_limit_bytes=_vmem_limit_bytes()),
    )(x, bias, *plist)


# --------------------- FFN (+ residual + LN2) kernels -------------------------
# Position-wise: rows flattened to (B*S, D) and tiled. If the bf16 W1/W2 fit
# the VMEM budget (v5e/v6e always, v7x for small models) use the full d_ff with
# resident weights; otherwise tile d_ff with a reduction axis + accumulator.

def ffn_full_kernel(x_ref, w1_ref, b1_ref, w2_ref, b2_ref, g_ref, b_ref, o_ref):
    xb = x_ref[...]                                                        # (TR, D) bf16
    h = jnp.dot(xb, w1_ref[...], preferred_element_type=jnp.float32) + b1_ref[...]
    # TODO(synk): tanh-approx GELU; PyTorch nn.GELU default is exact erf (tiny delta).
    h = jax.nn.gelu(h)
    ff = jnp.dot(h.astype(jnp.bfloat16), w2_ref[...],
                 preferred_element_type=jnp.float32) + b2_ref[...]
    out = _layernorm(x_ref[...].astype(jnp.float32) + ff, g_ref[...], b_ref[...])
    o_ref[...] = out.astype(o_ref.dtype)


def ffn_tiled_kernel(x_ref, w1_ref, b1_ref, w2_ref, b2_ref, g_ref, b_ref, o_ref, acc_ref):
    f = pl.program_id(1)

    @pl.when(f == 0)
    def _():
        acc_ref[...] = jnp.zeros_like(acc_ref)

    xb = x_ref[...]                                                        # (TR, D) bf16
    h = jnp.dot(xb, w1_ref[...], preferred_element_type=jnp.float32) + b1_ref[...]
    # TODO(synk): tanh-approx GELU; PyTorch nn.GELU default is exact erf (tiny delta).
    h = jax.nn.gelu(h)
    acc_ref[...] += jnp.dot(h.astype(jnp.bfloat16), w2_ref[...],
                            preferred_element_type=jnp.float32)

    @pl.when(f == pl.num_programs(1) - 1)
    def _():
        ff = acc_ref[...] + b2_ref[...]
        out = _layernorm(x_ref[...].astype(jnp.float32) + ff, g_ref[...], b_ref[...])
        o_ref[...] = out.astype(o_ref.dtype)


def ffn_block(x, params):
    B, S, D = x.shape
    d_ff = params["w1"].shape[1]
    rows = B * S
    tr = _pick_sublane_tile(rows, 512)
    xr = x.reshape(rows, D)
    vmem_limit = _vmem_limit_bytes()

    # Double-buffered bf16 W1 + W2 footprint.
    weight_bytes = 2 * (2 * D * d_ff * 2)
    if weight_bytes <= vmem_limit // 2:
        out = pl.pallas_call(
            ffn_full_kernel,
            out_shape=jax.ShapeDtypeStruct((rows, D), jnp.bfloat16),
            grid=(rows // tr,),
            in_specs=[
                pl.BlockSpec((tr, D), lambda r: (r, 0)),        # activation rows
                pl.BlockSpec((D, d_ff), lambda r: (0, 0)),      # W1 (resident)
                pl.BlockSpec((1, d_ff), lambda r: (0, 0)),      # b1
                pl.BlockSpec((d_ff, D), lambda r: (0, 0)),      # W2 (resident)
                pl.BlockSpec((1, D), lambda r: (0, 0)),          # b2
                pl.BlockSpec((1, D), lambda r: (0, 0)),          # ln2 gamma
                pl.BlockSpec((1, D), lambda r: (0, 0)),          # ln2 beta
            ],
            out_specs=pl.BlockSpec((tr, D), lambda r: (r, 0)),
            compiler_params=pltpu.CompilerParams(
                dimension_semantics=("parallel",),
                vmem_limit_bytes=vmem_limit),
        )(xr, params["w1"], params["b1"], params["w2"], params["b2"],
          params["ln2_g"], params["ln2_b"])
    else:
        tf = _pick_lane_tile(d_ff, 1024)
        out = pl.pallas_call(
            ffn_tiled_kernel,
            out_shape=jax.ShapeDtypeStruct((rows, D), jnp.bfloat16),
            grid=(rows // tr, d_ff // tf),
            in_specs=[
                pl.BlockSpec((tr, D), lambda r, f: (r, 0)),     # activation rows
                pl.BlockSpec((D, tf), lambda r, f: (0, f)),     # W1 column chunk
                pl.BlockSpec((1, tf), lambda r, f: (0, f)),     # b1 chunk
                pl.BlockSpec((tf, D), lambda r, f: (f, 0)),     # W2 row chunk
                pl.BlockSpec((1, D), lambda r, f: (0, 0)),       # b2
                pl.BlockSpec((1, D), lambda r, f: (0, 0)),       # ln2 gamma
                pl.BlockSpec((1, D), lambda r, f: (0, 0)),       # ln2 beta
            ],
            out_specs=pl.BlockSpec((tr, D), lambda r, f: (r, 0)),
            scratch_shapes=[pltpu.VMEM((tr, D), jnp.float32)],
            compiler_params=pltpu.CompilerParams(
                dimension_semantics=("parallel", "arbitrary"),
                vmem_limit_bytes=vmem_limit),
        )(xr, params["w1"], params["b1"], params["w2"], params["b2"],
          params["ln2_g"], params["ln2_b"])
    return out.reshape(B, S, D)


# ------------------------------ parameter setup -------------------------------

def init_params(key, vocab_size, d_model, num_heads, d_ff, max_len, num_layers):
    keys = jax.random.split(key, 3 + num_layers)
    std = 0.02

    def w(k, shape):  # matmul weights stored in bf16 (MXU operands)
        return (jax.random.normal(k, shape, jnp.float32) * std).astype(jnp.bfloat16)

    params = {
        "tok_emb": jax.random.normal(keys[0], (vocab_size, d_model), jnp.float32) * std,
        "pos_emb": jax.random.normal(keys[1], (max_len, d_model), jnp.float32) * std,
        "seg_emb": jax.random.normal(keys[2], (2, d_model), jnp.float32) * std,
        "emb_ln_g": jnp.ones((1, d_model), jnp.float32),
        "emb_ln_b": jnp.zeros((1, d_model), jnp.float32),
        "layers": [],
    }
    for li in range(num_layers):
        lk = jax.random.split(keys[3 + li], 6)
        layer = {
            "wq": w(lk[0], (d_model, d_model)),
            "bq": jnp.zeros((1, d_model), jnp.float32),
            "wk": w(lk[1], (d_model, d_model)),
            "bk": jnp.zeros((1, d_model), jnp.float32),
            "wv": w(lk[2], (d_model, d_model)),
            "bv": jnp.zeros((1, d_model), jnp.float32),
            "wo": w(lk[3], (d_model, d_model)),
            "bo": jnp.zeros((1, d_model), jnp.float32),
            "ln1_g": jnp.ones((1, d_model), jnp.float32),
            "ln1_b": jnp.zeros((1, d_model), jnp.float32),
            "w1": w(lk[4], (d_model, d_ff)),
            "b1": jnp.zeros((1, d_ff), jnp.float32),
            "w2": w(lk[5], (d_ff, d_model)),
            "b2": jnp.zeros((1, d_model), jnp.float32),
            "ln2_g": jnp.ones((1, d_model), jnp.float32),
            "ln2_b": jnp.zeros((1, d_model), jnp.float32),
        }
        params["layers"].append(layer)
    return params


# --------------------------------- forward ------------------------------------

def bert_forward(params, input_ids, segment_ids, attention_mask, num_heads):
    B, S = input_ids.shape
    # Embedding gathers are glue (plain JAX); the sum + layernorm are fused in Pallas.
    tok = jnp.take(params["tok_emb"], input_ids, axis=0)          # (B, S, D) f32
    seg = jnp.take(params["seg_emb"], segment_ids, axis=0)        # (B, S, D) f32
    pos = params["pos_emb"][:S][None, :, :]                       # (1, S, D) f32
    x = embed_layernorm(tok, seg, pos, params["emb_ln_g"], params["emb_ln_b"])  # bf16

    # Additive attention bias: 0 where kept, -1e9 where masked (B, 1, S), f32.
    if attention_mask is None:
        bias = jnp.zeros((B, 1, S), jnp.float32)
    else:
        m = attention_mask.astype(jnp.float32).reshape(B, 1, S)
        bias = (1.0 - m) * jnp.float32(-1e9)

    for layer in params["layers"]:
        x = attention_block(x, bias, layer, num_heads)
        x = ffn_block(x, layer)
    return x


# ----------------------------------- main --------------------------------------

if __name__ == "__main__":
    vocab_size = 64
    d_model = 128        # lane-dense test hidden size (multiple of 128)
    num_heads = 4
    d_ff = 256
    max_len = 32
    num_layers = 2
    B, S = 2, 16

    key = jax.random.PRNGKey(0)
    pkey, ikey, skey = jax.random.split(key, 3)
    params = init_params(pkey, vocab_size, d_model, num_heads, d_ff, max_len, num_layers)

    input_ids = jax.random.randint(ikey, (B, S), 0, vocab_size, dtype=jnp.int32)
    segment_ids = jax.random.randint(skey, (B, S), 0, 2, dtype=jnp.int32)
    attention_mask = jnp.ones((B, S), jnp.int32).at[1, S - 3:].set(0)  # mask last 3 toks of batch 1

    out = bert_forward(params, input_ids, segment_ids, attention_mask, num_heads)
    out = jax.block_until_ready(out)
    assert out.shape == (B, S, d_model)
    assert bool(jnp.all(jnp.isfinite(out.astype(jnp.float32))))
    print("KERNEL_OK")
</pallas_src>

<mosaic_0001>
module attributes {stable_mosaic.version = 11 : i64} {
  func.func @embed_ln_kernel(%arg0: i32, %arg1: i32, %arg2: memref<1x16x128xf32, #tpu.memory_space<vmem>>, %arg3: memref<1x16x128xf32, #tpu.memory_space<vmem>>, %arg4: memref<1x16x128xf32, #tpu.memory_space<vmem>>, %arg5: memref<1x128xf32, #tpu.memory_space<vmem>>, %arg6: memref<1x128xf32, #tpu.memory_space<vmem>>, %arg7: memref<1x16x128xbf16, #tpu.memory_space<vmem>>) attributes {dimension_semantics = [#tpu.dimension_semantics<parallel>, #tpu.dimension_semantics<parallel>], iteration_bounds = array<i64: 2, 1>, scalar_prefetch = 0 : i64, scratch_operands = 0 : i64, tpu.core_type = #tpu.core_type<tc>, window_params = [{transform_indices = @transform_0, window_bounds = array<i64: 1, 16, 128>}, {transform_indices = @transform_1, window_bounds = array<i64: 1, 16, 128>}, {transform_indices = @transform_2, window_bounds = array<i64: 1, 16, 128>}, {pipeline_mode = #tpu.pipeline_mode<synchronous>, transform_indices = @transform_3, window_bounds = array<i64: 1, 128>}, {pipeline_mode = #tpu.pipeline_mode<synchronous>, transform_indices = @transform_4, window_bounds = array<i64: 1, 128>}, {transform_indices = @transform_5, window_bounds = array<i64: 1, 16, 128>}]} {
    %c0 = arith.constant 0 : index
    %c0_0 = arith.constant 0 : index
    %c0_1 = arith.constant 0 : index
    %0 = vector.load %arg2[%c0, %c0_0, %c0_1] : memref<1x16x128xf32, #tpu.memory_space<vmem>>, vector<1x16x128xf32>
    %1 = vector.shape_cast %0 : vector<1x16x128xf32> to vector<16x128xf32>
    %c0_2 = arith.constant 0 : index
    %c0_3 = arith.constant 0 : index
    %c0_4 = arith.constant 0 : index
    %2 = vector.load %arg3[%c0_2, %c0_3, %c0_4] : memref<1x16x128xf32, #tpu.memory_space<vmem>>, vector<1x16x128xf32>
    %3 = vector.shape_cast %2 : vector<1x16x128xf32> to vector<16x128xf32>
    %4 = arith.addf %1, %3 : vector<16x128xf32>
    %c0_5 = arith.constant 0 : index
    %c0_6 = arith.constant 0 : index
    %c0_7 = arith.constant 0 : index
    %5 = vector.load %arg4[%c0_5, %c0_6, %c0_7] : memref<1x16x128xf32, #tpu.memory_space<vmem>>, vector<1x16x128xf32>
    %6 = vector.shape_cast %5 : vector<1x16x128xf32> to vector<16x128xf32>
    %7 = arith.addf %4, %6 : vector<16x128xf32>
    %c0_8 = arith.constant 0 : index
    %c0_9 = arith.constant 0 : index
    %8 = vector.load %arg5[%c0_8, %c0_9] : memref<1x128xf32, #tpu.memory_space<vmem>>, vector<1x128xf32>
    %c0_10 = arith.constant 0 : index
    %c0_11 = arith.constant 0 : index
    %9 = vector.load %arg6[%c0_10, %c0_11] : memref<1x128xf32, #tpu.memory_space<vmem>>, vector<1x128xf32>
    %cst = arith.constant dense<0.000000e+00> : vector<16xf32>
    %10 = vector.multi_reduction <add>, %7, %cst [1] : vector<16x128xf32> to vector<16xf32>
    %11 = vector.shape_cast %10 : vector<16xf32> to vector<16x1xf32>
    %cst_12 = arith.constant 1.280000e+02 : f32
    %12 = vector.broadcast %cst_12 : f32 to vector<16x1xf32>
    %13 = arith.divf %11, %12 : vector<16x1xf32>
    %14 = vector.broadcast %13 : vector<16x1xf32> to vector<16x128xf32>
    %15 = arith.subf %7, %14 : vector<16x128xf32>
    %16 = arith.mulf %15, %15 : vector<16x128xf32>
    %cst_13 = arith.constant dense<0.000000e+00> : vector<16xf32>
    %17 = vector.multi_reduction <add>, %16, %cst_13 [1] : vector<16x128xf32> to vector<16xf32>
    %18 = vector.shape_cast %17 : vector<16xf32> to vector<16x1xf32>
    %cst_14 = arith.constant 1.280000e+02 : f32
    %19 = vector.broadcast %cst_14 : f32 to vector<16x1xf32>
    %20 = arith.divf %18, %19 : vector<16x1xf32>
    %21 = vector.broadcast %13 : vector<16x1xf32> to vector<16x128xf32>
    %22 = arith.subf %7, %21 : vector<16x128xf32>
    %cst_15 = arith.constant 9.99999996E-13 : f32
    %23 = vector.broadcast %cst_15 : f32 to vector<16x1xf32>
    %24 = arith.addf %20, %23 : vector<16x1xf32>
    %25 = math.rsqrt %24 : vector<16x1xf32>
    %26 = vector.broadcast %25 : vector<16x1xf32> to vector<16x128xf32>
    %27 = arith.mulf %22, %26 : vector<16x128xf32>
    %28 = vector.broadcast %8 : vector<1x128xf32> to vector<16x128xf32>
    %29 = arith.mulf %27, %28 : vector<16x128xf32>
    %30 = vector.broadcast %9 : vector<1x128xf32> to vector<16x128xf32>
    %31 = arith.addf %29, %30 : vector<16x128xf32>
    %32 = arith.truncf %31 : vector<16x128xf32> to vector<16x128xbf16>
    %c0_16 = arith.constant 0 : index
    %c0_17 = arith.constant 0 : index
    %c0_18 = arith.constant 0 : index
    %33 = vector.load %arg7[%c0_16, %c0_17, %c0_18] : memref<1x16x128xbf16, #tpu.memory_space<vmem>>, vector<1x16x128xbf16>
    %34 = vector.shape_cast %33 : vector<1x16x128xbf16> to vector<16x128xbf16>
    %35 = vector.shape_cast %32 : vector<16x128xbf16> to vector<1x16x128xbf16>
    tpu.vector_store %arg7[%c0_16, %c0_17, %c0_18], %35 {strides = array<i32>} : memref<1x16x128xbf16, #tpu.memory_space<vmem>>, vector<1x16x128xbf16>,
    return
  }
  func.func @transform_0(%arg0: i32, %arg1: i32) -> (i32, i32, i32) {
    %c0_i32 = arith.constant 0 : i32
    %c0_i32_0 = arith.constant 0 : i32
    return %arg0, %arg1, %c0_i32 : i32, i32, i32
  }
  func.func @transform_1(%arg0: i32, %arg1: i32) -> (i32, i32, i32) {
    %c0_i32 = arith.constant 0 : i32
    %c0_i32_0 = arith.constant 0 : i32
    return %arg0, %arg1, %c0_i32 : i32, i32, i32
  }
  func.func @transform_2(%arg0: i32, %arg1: i32) -> (i32, i32, i32) {
    %c0_i32 = arith.constant 0 : i32
    %c0_i32_0 = arith.constant 0 : i32
    %c0_i32_1 = arith.constant 0 : i32
    return %c0_i32, %arg1, %c0_i32_0 : i32, i32, i32
  }
  func.func @transform_3(%arg0: i32, %arg1: i32) -> (i32, i32) {
    %c0_i32 = arith.constant 0 : i32
    %c0_i32_0 = arith.constant 0 : i32
    %c0_i32_1 = arith.constant 0 : i32
    return %c0_i32, %c0_i32_0 : i32, i32
  }
  func.func @transform_4(%arg0: i32, %arg1: i32) -> (i32, i32) {
    %c0_i32 = arith.constant 0 : i32
    %c0_i32_0 = arith.constant 0 : i32
    %c0_i32_1 = arith.constant 0 : i32
    return %c0_i32, %c0_i32_0 : i32, i32
  }
  func.func @transform_5(%arg0: i32, %arg1: i32) -> (i32, i32, i32) {
    %c0_i32 = arith.constant 0 : i32
    %c0_i32_0 = arith.constant 0 : i32
    return %arg0, %arg1, %c0_i32 : i32, i32, i32
  }
}

</mosaic_0001>

<llo_original>
// kernel: tpu_custom_call.1
$region0: #{tpu_custom_call.1}
  #allocation0 [shape = 'u32[]', space=smem, size = 0x4, offset = 0x4, fixed_abs, tag = 'smem constant byte address 0x4 - core index']
  #allocation1 [shape = 'u32[144,128]{1,0:T(1,128)}', space=vmem, size = 0x12000, scoped, tag = 'internal scratch']
  %s0 = inlined_call_operand.hbm [shape: f32[2,16,128], index: 0, kind: input, shape index: {}]
  %s1 = inlined_call_operand.hbm [shape: f32[2,16,128], index: 1, kind: input, shape index: {}]
  %s2 = inlined_call_operand.hbm [shape: f32[1,16,128], index: 2, kind: input, shape index: {}]
  %s3 = inlined_call_operand.hbm [shape: f32[1,128], index: 3, kind: input, shape index: {}]
  %s4 = inlined_call_operand.hbm [shape: f32[1,128], index: 4, kind: input, shape index: {}]
  %s5 = inlined_call_operand.hbm [shape: bf16[2,16,128], index: 5, kind: output, shape index: {}]
  %s6 = sld [smem:[#allocation0]]
  $region73: #{tpu_custom_call.1} parent=0
    _
  %s8 = ssub.s32 1, %s6
  %s9 = scalar_select 0, %s8, %s6
  $region1: #{tpu_custom_call.1} parent=0
    #allocation2 [shape = 'u8[16384]{0}', space=vmem, size = 0x4000, scoped, tag = 'input window, operand 0']
    #allocation3 [shape = 's32[2]{0}', space=sflag, size = 0x8, scoped, tag = 'scoped memory for tpu_custom_call.1']
    #allocation4 [shape = 's32[2]{0}', space=sflag, size = 0x8, scoped, tag = 'scoped memory for tpu_custom_call.1']
    #allocation5 [shape = 'u8[16384]{0}', space=vmem, size = 0x4000, scoped, tag = 'input window, operand 1']
    #allocation6 [shape = 's32[2]{0}', space=sflag, size = 0x8, scoped, tag = 'scoped memory for tpu_custom_call.1']
    #allocation7 [shape = 'u8[8192]{0}', space=vmem, size = 0x2000, scoped, tag = 'input window, operand 2, single buffered']
    #allocation8 [shape = 'u8[512]{0}', space=vmem, size = 0x400, scoped, tag = 'input window, operand 3, single buffered']
    #allocation9 [shape = 's32[1]{0}', space=sflag, size = 0x4, scoped, tag = 'scoped memory for tpu_custom_call.1']
    #allocation10 [shape = 'u8[512]{0}', space=vmem, size = 0x400, scoped, tag = 'input window, operand 4, single buffered']
    #allocation11 [shape = 'u8[8192]{0}', space=vmem, size = 0x2000, scoped, tag = 'output window, operand 0']
    %10 = vsyncpa [#allocation3], 0
    %s11 = scalar_lea.sflag [#allocation3], 1
    %12 = vsyncpa %s11, 0
    %13 = vsyncpa [#allocation6], 0
    %s14 = scalar_lea.sflag [#allocation6], 1
    %15 = vsyncpa %s14, 0
    %16 = vsyncpa [#allocation9], 0
    %17 = vsyncpa [#allocation4], 0
    %s18 = scalar_lea.sflag [#allocation4], 1
    %19 = vsyncpa %s18, 0
    loop: start=0, step=1, limit=4
    $region2: #{tpu_custom_call.1} parent=1 // loop_pre_header
      _
    $region3: #{tpu_custom_call.1} parent=1 // loop_header
      %s21 = sphi 0, %s25
      %p22 = scmp.ge.s32.totalorder %s21, 4
      %s28 = sphi 0, %s40
      %s29 = sphi 0, %s36
      %s30 = sphi 0, %s28
      %s31 = sphi 0, %s29
      %s32 = sphi 0, %s30
      %s33 = sphi 0, %s31
      %s45 = sphi 0, %s47
      %s48 = sphi 0, %s45
      %s49 = sphi 0, %s48
      %s65 = sphi 0, %s49
      %s73 = sphi 0, %s75
      %s76 = sphi 0, %s73
      %s77 = sphi 0, %s76
      %s93 = sphi 0, %s77
      %s99 = sphi 0, %s101
      %s102 = sphi 0, %s99
      %s103 = sphi 0, %s102
      %s119 = sphi 0, %s103
      %s123 = sphi 0, %s123
      %s125 = sphi 0, %s123
      %s126 = sphi 0, %s125
      %s140 = sphi 0, %s126
      %s144 = sphi 0, %s144
      %s146 = sphi 0, %s144
      %s147 = sphi 0, %s146
      %s161 = sphi 0, %s147
      %s169 = sphi 0, %s171
      %s172 = sphi 0, %s169
      %s173 = sphi 0, %s172
      %s189 = sphi 0, %s173
    $region4: #{tpu_custom_call.1} parent=1 // loop_header_branch
      %24 = sbr.rel (%p22) target = $region8
    $region5: #{tpu_custom_call.1} parent=1 // loop_body
      %s26 = ssub.s32 %s21, 1
      %s27 = ssub.s32 %s21, 2
      %s34 = sadd.s32 1, %s29
      %p35 = scmp.ge.s32.totalorder %s34, 1
      %s36 = scalar_select %p35, 0, %s34
      %s37 = sadd.s32 1, %s28
      %s38 = scalar_select %p35, %s37, %s28
      %p39 = scmp.ge.s32.totalorder %s38, 2
      %s40 = scalar_select %p39, 0, %s38
      %s41 = ssub.s32 %s28, %s40
      %s42 = ssub.s32 %s29, %s36
      %s43 = sor.u32 %s41, %s42
      %p44 = scmp.eq.s32.totalorder %s43, 0
      %s46 = sadd.s32 %s45, 1
      %s47 = scalar_select %p44, %s45, %s46
      %p50 = pneg %p44
      %p51 = scmp.eq.s32.totalorder %s21, 1
      %p52 = por %p50, %p51
      %p53 = scmp.ne.s32.totalorder %s45, %s48
      %p54 = scmp.eq.s32.totalorder %s21, 0
      %p55 = por %p53, %p54
      %p56 = scmp.ne.s32.totalorder %s45, %s48
      %p57 = scmp.eq.s32.totalorder %s26, 1
      %p58 = por %p56, %p57
      %p59 = scmp.ne.s32.totalorder %s48, %s49
      %p60 = scmp.eq.s32.totalorder %s26, 0
      %p61 = por %p59, %p60
      %p62 = scmp.ne.s32.totalorder %s48, %s49
      %p63 = scmp.eq.s32.totalorder %s27, 1
      %p64 = por %p62, %p63
      %p66 = scmp.ne.s32.totalorder %s49, %s65
      %p67 = scmp.eq.s32.totalorder %s27, 0
      %p68 = por %p66, %p67
      %s69 = ssub.s32 %s28, %s40
      %s70 = ssub.s32 %s29, %s36
      %s71 = sor.u32 %s69, %s70
      %p72 = scmp.eq.s32.totalorder %s71, 0
      %s74 = sadd.s32 %s73, 1
      %s75 = scalar_select %p72, %s73, %s74
      %p78 = pneg %p72
      %p79 = scmp.eq.s32.totalorder %s21, 1
      %p80 = por %p78, %p79
      %p81 = scmp.ne.s32.totalorder %s73, %s76
      %p82 = scmp.eq.s32.totalorder %s21, 0
      %p83 = por %p81, %p82
      %p84 = scmp.ne.s32.totalorder %s73, %s76
      %p85 = scmp.eq.s32.totalorder %s26, 1
      %p86 = por %p84, %p85
      %p87 = scmp.ne.s32.totalorder %s76, %s77
      %p88 = scmp.eq.s32.totalorder %s26, 0
      %p89 = por %p87, %p88
      %p90 = scmp.ne.s32.totalorder %s76, %s77
      %p91 = scmp.eq.s32.totalorder %s27, 1
      %p92 = por %p90, %p91
      %p94 = scmp.ne.s32.totalorder %s77, %s93
      %p95 = scmp.eq.s32.totalorder %s27, 0
      %p96 = por %p94, %p95
      %s97 = ssub.s32 %s29, %s36
      %p98 = scmp.eq.s32.totalorder %s97, 0
      %s100 = sadd.s32 %s99, 1
      %s101 = scalar_select %p98, %s99, %s100
      %p104 = pneg %p98
      %p105 = scmp.eq.s32.totalorder %s21, 1
      %p106 = por %p104, %p105
      %p107 = scmp.ne.s32.totalorder %s99, %s102
      %p108 = scmp.eq.s32.totalorder %s21, 0
      %p109 = por %p107, %p108
      %p110 = scmp.ne.s32.totalorder %s99, %s102
      %p111 = scmp.eq.s32.totalorder %s26, 1
      %p112 = por %p110, %p111
      %p113 = scmp.ne.s32.totalorder %s102, %s103
      %p114 = scmp.eq.s32.totalorder %s26, 0
      %p115 = por %p113, %p114
      %p116 = scmp.ne.s32.totalorder %s102, %s103
      %p117 = scmp.eq.s32.totalorder %s27, 1
      %p118 = por %p116, %p117
      %p120 = scmp.ne.s32.totalorder %s103, %s119
      %p121 = scmp.eq.s32.totalorder %s27, 0
      %p122 = por %p120, %p121
      %s124 = sadd.s32 %s123, 1
      %p127 = scmp.eq.s32.totalorder %s21, 1
      %p128 = scmp.ne.s32.totalorder %s123, %s125
      %p129 = scmp.eq.s32.totalorder %s21, 0
      %p130 = por %p128, %p129
      %p131 = scmp.ne.s32.totalorder %s123, %s125
      %p132 = scmp.eq.s32.totalorder %s26, 1
      %p133 = por %p131, %p132
      %p134 = scmp.ne.s32.totalorder %s125, %s126
      %p135 = scmp.eq.s32.totalorder %s26, 0
      %p136 = por %p134, %p135
      %p137 = scmp.ne.s32.totalorder %s125, %s126
      %p138 = scmp.eq.s32.totalorder %s27, 1
      %p139 = por %p137, %p138
      %p141 = scmp.ne.s32.totalorder %s126, %s140
      %p142 = scmp.eq.s32.totalorder %s27, 0
      %p143 = por %p141, %p142
      %s145 = sadd.s32 %s144, 1
      %p148 = scmp.eq.s32.totalorder %s21, 1
      %p149 = scmp.ne.s32.totalorder %s144, %s146
      %p150 = scmp.eq.s32.totalorder %s21, 0
      %p151 = por %p149, %p150
      %p152 = scmp.ne.s32.totalorder %s144, %s146
      %p153 = scmp.eq.s32.totalorder %s26, 1
      %p154 = por %p152, %p153
      %p155 = scmp.ne.s32.totalorder %s146, %s147
      %p156 = scmp.eq.s32.totalorder %s26, 0
      %p157 = por %p155, %p156
      %p158 = scmp.ne.s32.totalorder %s146, %s147
      %p159 = scmp.eq.s32.totalorder %s27, 1
      %p160 = por %p158, %p159
      %p162 = scmp.ne.s32.totalorder %s147, %s161
      %p163 = scmp.eq.s32.totalorder %s27, 0
      %p164 = por %p162, %p163
      %s165 = ssub.s32 %s28, %s40
      %s166 = ssub.s32 %s29, %s36
      %s167 = sor.u32 %s165, %s166
      %p168 = scmp.eq.s32.totalorder %s167, 0
      %s170 = sadd.s32 %s169, 1
      %s171 = scalar_select %p168, %s169, %s170
      %p174 = pneg %p168
      %p175 = scmp.eq.s32.totalorder %s21, 1
      %p176 = por %p174, %p175
      %p177 = scmp.ne.s32.totalorder %s169, %s172
      %p178 = scmp.eq.s32.totalorder %s21, 0
      %p179 = por %p177, %p178
      %p180 = scmp.ne.s32.totalorder %s169, %s172
      %p181 = scmp.eq.s32.totalorder %s26, 1
      %p182 = por %p180, %p181
      %p183 = scmp.ne.s32.totalorder %s172, %s173
      %p184 = scmp.eq.s32.totalorder %s26, 0
      %p185 = por %p183, %p184
      %p186 = scmp.ne.s32.totalorder %s172, %s173
      %p187 = scmp.eq.s32.totalorder %s27, 1
      %p188 = por %p186, %p187
      %p190 = scmp.ne.s32.totalorder %s173, %s189
      %p191 = scmp.eq.s32.totalorder %s27, 0
      %p192 = por %p190, %p191
      %p193 = scmp.le.s32.totalorder 1, %s21
      %p194 = scmp.lt.s32.totalorder %s21, 3
      %p195 = pnand %p193, %p194
      %p196 = pneg %p195
      // Predicated region
      $region9: #{tpu_custom_call.1} parent=5 // pred_check
        _
      $region10: #{tpu_custom_call.1} parent=5 // pred_check_branch
        %198 = sbr.rel (%p195) target = $region12
      $region11: #{tpu_custom_call.1} parent=5 // pred_region
        %s199 = ssub.s32 %s21, 1
        // Predicated region
        $region13: #{tpu_custom_call.1} parent=11 // pred_check
          %p200 = pneg %p115
        $region14: #{tpu_custom_call.1} parent=11 // pred_check_branch
          %202 = sbr.rel (%p200) target = $region16
        $region15: #{tpu_custom_call.1} parent=11 // pred_region
          %s203 = smul.u32 2, %s31
          %s205 = ssub.s32 256, 256
          %206 = vsyncadd [#allocation6], %s205
          %s207 = smul.addr %s203, 128
          %s208 = scalar_lea.hbm %s2, %s207
          %s209 = sshll.u32 [#allocation7], 4
          %s210 = int_to_ptr.vmem [resolvable:$true] %s209
          %215 = dma.hbm_to_vmem [thread:$0]  %s208, 256, %s210, [#allocation6], 128, 128, 8
        $region16: #{tpu_custom_call.1} parent=11 // pred_fallthru
          _
        // Predicated region
        $region17: #{tpu_custom_call.1} parent=11 // pred_check
          %p216 = pneg %p136
        $region18: #{tpu_custom_call.1} parent=11 // pred_check_branch
          %218 = sbr.rel (%p216) target = $region20
        $region19: #{tpu_custom_call.1} parent=11 // pred_region
          %s220 = ssub.s32 16, 16
          %221 = vsyncadd [#allocation9], %s220
          %s223 = sshll.u32 [#allocation8], 4
          %s224 = int_to_ptr.vmem [resolvable:$true] %s223
          %226 = dma.hbm_to_vmem [thread:$0]  %s3, 16, %s224, [#allocation9]
        $region20: #{tpu_custom_call.1} parent=11 // pred_fallthru
          _
        // Predicated region
        $region21: #{tpu_custom_call.1} parent=11 // pred_check
          %p227 = pneg %p157
        $region22: #{tpu_custom_call.1} parent=11 // pred_check_branch
          %229 = sbr.rel (%p227) target = $region24
        $region23: #{tpu_custom_call.1} parent=11 // pred_region
          %s231 = ssub.s32 16, 16
          %232 = vsyncadd [#allocation9], %s231
          %s234 = sshll.u32 [#allocation10], 4
          %s235 = int_to_ptr.vmem [resolvable:$true] %s234
          %237 = dma.hbm_to_vmem [thread:$0]  %s4, 16, %s235, [#allocation9]
        $region24: #{tpu_custom_call.1} parent=11 // pred_fallthru
          _
      $region12: #{tpu_custom_call.1} parent=5 // pred_fallthru
        _
      %p238 = scmp.lt.s32.totalorder %s21, 2
      // Predicated region
      $region25: #{tpu_custom_call.1} parent=5 // pred_check
        %p239 = pneg %p238
      $region26: #{tpu_custom_call.1} parent=5 // pred_check_branch
        %241 = sbr.rel (%p239) target = $region28
      $region27: #{tpu_custom_call.1} parent=5 // pred_region
        // Predicated region
        $region29: #{tpu_custom_call.1} parent=27 // pred_check
          %p242 = pneg %p55
        $region30: #{tpu_custom_call.1} parent=27 // pred_check_branch
          %244 = sbr.rel (%p242) target = $region32
        $region31: #{tpu_custom_call.1} parent=27 // pred_region
          %s245 = sand.u32 %s45, 1
          %s246 = scalar_lea.sflag [#allocation3], %s245
          %s247 = sand.u32 %s45, 1
          %s248 = smul.addr %s247, 16
          %s249 = scalar_lea.vmem [#allocation2], %s248
          %s250 = smul.u32 2, %s29
          %s252 = ssub.s32 256, 256
          %253 = vsyncadd %s246, %s252
          %s254 = smul.addr %s28, 2
          %s255 = sadd.s32 %s250, %s254
          %s256 = smul.addr %s255, 128
          %s257 = scalar_lea.hbm %s0, %s256
          %s258 = sshll.u32 %s249, 4
          %s259 = int_to_ptr.vmem [resolvable:$true] %s258
          %264 = dma.hbm_to_vmem [thread:$0]  %s257, 256, %s259, %s246, 128, 128, 8
        $region32: #{tpu_custom_call.1} parent=27 // pred_fallthru
          _
        // Predicated region
        $region33: #{tpu_custom_call.1} parent=27 // pred_check
          %p265 = pneg %p83
        $region34: #{tpu_custom_call.1} parent=27 // pred_check_branch
          %267 = sbr.rel (%p265) target = $region36
        $region35: #{tpu_custom_call.1} parent=27 // pred_region
          %s268 = sand.u32 %s21, 1
          %s269 = scalar_lea.sflag [#allocation6], %s268
          %s270 = sand.u32 %s73, 1
          %s271 = smul.addr %s270, 16
          %s272 = scalar_lea.vmem [#allocation5], %s271
          %s273 = smul.u32 2, %s29
          %s275 = ssub.s32 256, 256
          %276 = vsyncadd %s269, %s275
          %s277 = smul.addr %s28, 2
          %s278 = sadd.s32 %s273, %s277
          %s279 = smul.addr %s278, 128
          %s280 = scalar_lea.hbm %s1, %s279
          %s281 = sshll.u32 %s272, 4
          %s282 = int_to_ptr.vmem [resolvable:$true] %s281
          %287 = dma.hbm_to_vmem [thread:$0]  %s280, 256, %s282, %s269, 128, 128, 8
        $region36: #{tpu_custom_call.1} parent=27 // pred_fallthru
          _
      $region28: #{tpu_custom_call.1} parent=5 // pred_fallthru
        _
      %p288 = scmp.le.s32.totalorder 1, %s21
      %p289 = scmp.lt.s32.totalorder %s21, 3
      %p290 = pnand %p288, %p289
      %p291 = pneg %p290
      // Predicated region
      $region37: #{tpu_custom_call.1} parent=5 // pred_check
        _
      $region38: #{tpu_custom_call.1} parent=5 // pred_check_branch
        %293 = sbr.rel (%p290) target = $region40
      $region39: #{tpu_custom_call.1} parent=5 // pred_region
        %s294 = ssub.s32 %s21, 1
        %s295 = sand.u32 %s48, 1
        %s296 = scalar_lea.sflag [#allocation3], %s295
        %s297 = sand.u32 %s48, 1
        %s298 = smul.addr %s297, 16
        %s299 = scalar_lea.vmem [#allocation2], %s298
        // Predicated region
        $region41: #{tpu_custom_call.1} parent=39 // pred_check
          %p300 = pneg %p61
        $region42: #{tpu_custom_call.1} parent=39 // pred_check_branch
          %302 = sbr.rel (%p300) target = $region44
        $region43: #{tpu_custom_call.1} parent=39 // pred_region
          %303 = dma.done %s296, 256
        $region44: #{tpu_custom_call.1} parent=39 // pred_fallthru
          _
        %s304 = sand.u32 %s26, 1
        %s305 = scalar_lea.sflag [#allocation6], %s304
        %s306 = sand.u32 %s76, 1
        %s307 = smul.addr %s306, 16
        %s308 = scalar_lea.vmem [#allocation5], %s307
        // Predicated region
        $region45: #{tpu_custom_call.1} parent=39 // pred_check
          %p309 = pneg %p89
        $region46: #{tpu_custom_call.1} parent=39 // pred_check_branch
          %311 = sbr.rel (%p309) target = $region48
        $region47: #{tpu_custom_call.1} parent=39 // pred_region
          %312 = dma.done %s305, 256
        $region48: #{tpu_custom_call.1} parent=39 // pred_fallthru
          _
        // Predicated region
        $region49: #{tpu_custom_call.1} parent=39 // pred_check
          %p313 = pneg %p115
        $region50: #{tpu_custom_call.1} parent=39 // pred_check_branch
          %315 = sbr.rel (%p313) target = $region52
        $region51: #{tpu_custom_call.1} parent=39 // pred_region
          %316 = dma.done [#allocation6], 256
        $region52: #{tpu_custom_call.1} parent=39 // pred_fallthru
          _
        // Predicated region
        $region53: #{tpu_custom_call.1} parent=39 // pred_check
          %p317 = pneg %p136
        $region54: #{tpu_custom_call.1} parent=39 // pred_check_branch
          %319 = sbr.rel (%p317) target = $region56
        $region55: #{tpu_custom_call.1} parent=39 // pred_region
          %320 = dma.done [#allocation9], 16
        $region56: #{tpu_custom_call.1} parent=39 // pred_fallthru
          _
        // Predicated region
        $region57: #{tpu_custom_call.1} parent=39 // pred_check
          %p321 = pneg %p157
        $region58: #{tpu_custom_call.1} parent=39 // pred_check_branch
          %323 = sbr.rel (%p321) target = $region60
        $region59: #{tpu_custom_call.1} parent=39 // pred_region
          %324 = dma.done [#allocation9], 16
        $region60: #{tpu_custom_call.1} parent=39 // pred_fallthru
          _
        %s325 = sand.u32 %s48, 1
        %s326 = scalar_lea.sflag [#allocation3], %s325
        %s327 = sand.u32 %s48, 1
        %s328 = smul.addr %s327, 16
        %s329 = scalar_lea.vmem [#allocation2], %s328
        %p330 = pneg %p61
        %p331 = pneg %p58
        %s332 = sand.u32 %s26, 1
        %s333 = scalar_lea.sflag [#allocation6], %s332
        %s334 = sand.u32 %s76, 1
        %s335 = smul.addr %s334, 16
        %s336 = scalar_lea.vmem [#allocation5], %s335
        %p337 = pneg %p89
        %p338 = pneg %p86
        %p339 = pneg %p115
        %p340 = pneg %p112
        %p341 = pneg %p136
        %p342 = pneg %p133
        %p343 = pneg %p157
        %p344 = pneg %p154
        %p345 = pneg %p185
        %p346 = pneg %p182
        %s347 = sand.u32 %s172, 1
        %s348 = scalar_lea.sflag [#allocation4], %s347
        %s349 = sand.u32 %s172, 1
        %s350 = smul.addr %s349, 8
        %s351 = scalar_lea.vmem [#allocation11], %s350
        %s352 = smul.u32 2, %s31
        %s353 = smul.u32 2, %s31
        %s354 = smul.u32 2, %s31
        %s355 = smul.u32 2, %s31
        %v356 = vld [vmem:[%s299] sm:$0xff]
        %v357 = vld [vmem:[%s299 + $0x8] sm:$0xff]
        %v358 = vld [vmem:[%s308] sm:$0xff]
        %v359 = vld [vmem:[%s308 + $0x8] sm:$0xff]
        %v360 = vadd.f32 %v356, %v358
        %v361 = vadd.f32 %v357, %v359
        %v362 = vld [vmem:[#allocation7] sm:$0xff]
        %v363 = vld [vmem:[#allocation7 + $0x8] sm:$0xff]
        %v364 = vadd.f32 %v360, %v362
        %v365 = vadd.f32 %v361, %v363
        %v366 = vld [vmem:[#allocation8] sm:$0x1]
        %v367 = vld [vmem:[#allocation10] sm:$0x1]
        %368 = vadd.xlane.f32.xlu0 %v364
        %v369 = vpop.xlane.xlu0 %368
        %370 = vadd.xlane.f32.xlu0 %v365
        %v371 = vpop.xlane.xlu0 %370
        %v372 = vrcp.pop 128.0
        %v373 = vmul.f32 %v369, %v372
        %v374 = vmul.f32 %v371, %v372
        %v375 = vsub.f32 %v364, %v373
        %v376 = vsub.f32 %v365, %v374
        %v377 = vmul.f32 %v375, %v375
        %v378 = vmul.f32 %v376, %v376
        %379 = vadd.xlane.f32.xlu0 %v377
        %v380 = vpop.xlane.xlu0 %379
        %381 = vadd.xlane.f32.xlu0 %v378
        %v382 = vpop.xlane.xlu0 %381
        %v383 = vmul.f32 %v380, %v372
        %v384 = vmul.f32 %v382, %v372
        %v385 = vadd.f32 %v383, 1e-12
        %v386 = vadd.f32 %v384, 1e-12
        %v387 = vrsqrt.pop %v385
        %v388 = vrsqrt.pop %v386
        %v389 = vmul.f32 %v375, %v387
        %v390 = vmul.f32 %v376, %v388
        %v392 = vlaneseq
        %v393 = vshrl.u32 %v392, 7
        %v394 = vsub.s32 0, %v393
        %v395 = vrot.slane %v366, %v394
        %v397 = vmul.f32 %v389, %v395
        %v398 = vmul.f32 %v390, %v395
        %v400 = vlaneseq
        %v401 = vshrl.u32 %v400, 7
        %v402 = vsub.s32 0, %v401
        %v403 = vrot.slane %v367, %v402
        %v405 = vadd.f32 %v397, %v403
        %v406 = vadd.f32 %v398, %v403
        %v407 = vpack.c.bf16 %v406, %v405
        %v409 = vunpack.c.l.b16 %v407
        %v410 = vunpack.c.h.b16 %v407
        %v411 = vpack.c.b16 %v409, %v409
        %v412 = vpack.c.b16 %v410, %v410
        %415 = vst [vmem:[%s351] sm:$0xf] %v411
        %416 = vst [vmem:[%s351 + $0x4] sm:$0xf] %v412
        %s417 = sand.u32 %s172, 1
        %s418 = scalar_lea.sflag [#allocation4], %s417
        %s419 = sand.u32 %s172, 1
        %s420 = smul.addr %s419, 8
        %s421 = scalar_lea.vmem [#allocation11], %s420
        // Predicated region
        $region61: #{tpu_custom_call.1} parent=39 // pred_check
          %p422 = pneg %p182
        $region62: #{tpu_custom_call.1} parent=39 // pred_check_branch
          %424 = sbr.rel (%p422) target = $region64
        $region63: #{tpu_custom_call.1} parent=39 // pred_region
          %s425 = smul.u32 2, %s31
          %s427 = ssub.s32 128, 128
          %428 = vsyncadd %s418, %s427
          %s429 = smul.addr %s30, 2
          %s430 = sadd.s32 %s425, %s429
          %s431 = smul.addr %s430, 64
          %s432 = scalar_lea.hbm %s5, %s431
          %s433 = sshll.u32 %s421, 4
          %s434 = int_to_ptr.vmem [resolvable:$true] %s433
          %439 = dma.vmem_to_hbm [thread:$0]  %s434, 128, %s432, %s418, 64, 64, 4
        $region64: #{tpu_custom_call.1} parent=39 // pred_fallthru
          _
      $region40: #{tpu_custom_call.1} parent=5 // pred_fallthru
        _
      %p440 = scmp.le.s32.totalorder 2, %s21
      // Predicated region
      $region65: #{tpu_custom_call.1} parent=5 // pred_check
        %p441 = pneg %p440
      $region66: #{tpu_custom_call.1} parent=5 // pred_check_branch
        %443 = sbr.rel (%p441) target = $region68
      $region67: #{tpu_custom_call.1} parent=5 // pred_region
        %s444 = ssub.s32 %s21, 2
        // Predicated region
        $region69: #{tpu_custom_call.1} parent=67 // pred_check
          %p445 = pneg %p188
        $region70: #{tpu_custom_call.1} parent=67 // pred_check_branch
          %447 = sbr.rel (%p445) target = $region72
        $region71: #{tpu_custom_call.1} parent=67 // pred_region
          %s448 = sand.u32 %s173, 1
          %s449 = scalar_lea.sflag [#allocation4], %s448
          %s450 = sand.u32 %s173, 1
          %s451 = smul.addr %s450, 8
          %s452 = scalar_lea.vmem [#allocation11], %s451
          %453 = dma.done %s449, 128
        $region72: #{tpu_custom_call.1} parent=67 // pred_fallthru
          _
      $region68: #{tpu_custom_call.1} parent=5 // pred_fallthru
        _
    $region6: #{tpu_custom_call.1} parent=1 // loop_footer
      %s25 = sadd.s32 1, %s21
    $region7: #{tpu_custom_call.1} parent=1 // loop_footer_branch
      %20 = sbr.rel target = $region3
    $region8: #{tpu_custom_call.1} parent=1 // loop_exit
      _
    %454 = vsyncpa [#allocation3], 1
    %s455 = scalar_lea.sflag [#allocation3], 1
    %456 = vsyncpa %s455, 1
    %457 = vsyncpa [#allocation6], 1
    %s458 = scalar_lea.sflag [#allocation6], 1
    %459 = vsyncpa %s458, 1
    %460 = vsyncpa [#allocation9], 1
    %461 = vsyncpa [#allocation4], 1
    %s462 = scalar_lea.sflag [#allocation4], 1
    %463 = vsyncpa %s462, 1

</llo_original>
